<compile_context>
chip_gen: v7x
topology: tpu7x:2x2x1
jax: 0.10.0
libtpu: 0.0.40
codegen_flags: <defaults>
</compile_context>

<pallas_src>
import functools

import jax
import jax.numpy as jnp
from jax import lax
from jax.experimental import pallas as pl
from jax.experimental.pallas import tpu as pltpu


def _partial_sum_block(partial):
    """Embed a scalar partial sum into a lane-dense (8, 128) output block."""
    rows = lax.broadcasted_iota(jnp.int32, (8, 128), 0)
    cols = lax.broadcasted_iota(jnp.int32, (8, 128), 1)
    return jnp.where((rows == 0) & (cols == 0), partial, 0.0).astype(jnp.float32)


def _masked_diff(x_ref, y_ref, bc):
    """x - y with planes past the end of a partial tail block zeroed."""
    shape = x_ref.shape
    rem = bc - pl.program_id(0) * shape[0]       # valid planes in this block
    plane_id = lax.broadcasted_iota(jnp.int32, shape, 0)
    # select (not multiply) so garbage in the padded tail cannot propagate
    return jnp.where(plane_id < rem, x_ref[...] - y_ref[...], 0.0)


def _fft_loss_kernel_fused(x_ref, y_ref, fre_ref, fim_ref, o_ref, *, bc):
    """Small planes: full 2-D DFT as two (T,HW) @ (HW,HW) Kronecker matmuls."""
    d = _masked_diff(x_ref, y_ref, bc).astype(jnp.bfloat16)             # (T, HW)
    re = jnp.dot(d, fre_ref[...], preferred_element_type=jnp.float32)
    im = jnp.dot(d, fim_ref[...], preferred_element_type=jnp.float32)
    o_ref[...] = _partial_sum_block(jnp.sum(jnp.sqrt(re * re + im * im)))


def _fft_loss_kernel_separable(x_ref, y_ref, cw_ref, sw_ref, ch_ref, sh_ref,
                               o_ref, *, bc):
    """General planes: W-axis DFT then H-axis DFT, all as flat 2-D matmuls."""
    t, h, w = x_ref.shape
    d = _masked_diff(x_ref, y_ref, bc).astype(jnp.bfloat16).reshape(t * h, w)

    # Stage 1: contraction over W (the minor axis) -> native MXU matmuls.
    ar = jnp.dot(d, cw_ref[...], preferred_element_type=jnp.float32)    # (T*H, W)
    ai = jnp.dot(d, sw_ref[...], preferred_element_type=jnp.float32)    # (T*H, W)

    # Stage 2: contraction over H. Cast to bf16 BEFORE the minor-dim transpose
    # (halves XLU bytes), then flat matmuls with M = T*W.
    art = jnp.transpose(ar.astype(jnp.bfloat16).reshape(t, h, w),
                        (0, 2, 1)).reshape(t * w, h)
    ait = jnp.transpose(ai.astype(jnp.bfloat16).reshape(t, h, w),
                        (0, 2, 1)).reshape(t * w, h)
    rc = jnp.dot(art, ch_ref[...], preferred_element_type=jnp.float32)  # Ar.Ch
    rs = jnp.dot(art, sh_ref[...], preferred_element_type=jnp.float32)  # Ar.Sh
    ic = jnp.dot(ait, ch_ref[...], preferred_element_type=jnp.float32)  # Ai.Ch
    iss = jnp.dot(ait, sh_ref[...], preferred_element_type=jnp.float32) # Ai.Sh

    fre = rc - iss              # Re(F) (transposed layout; fine for the sum)
    fim = rs + ic               # -Im(F); sign irrelevant for the magnitude
    o_ref[...] = _partial_sum_block(jnp.sum(jnp.sqrt(fre * fre + fim * fim)))


def _dft_cos_sin(n):
    """cos/sin DFT matrices with exact integer-mod twiddle angles."""
    k = jnp.arange(n, dtype=jnp.int32)
    m = (k[:, None] * k[None, :]) % n            # reduce before float multiply
    ang = (2.0 * jnp.pi / n) * m.astype(jnp.float32)
    return jnp.cos(ang), jnp.sin(ang)


def _generation_params():
    """(VMEM budget bytes, fused-path H*W threshold) for the local TPU gen."""
    kind = ""
    try:
        kind = jax.devices()[0].device_kind.lower()
    except Exception:
        pass
    try:
        vmem_cap = int(pltpu.get_tpu_info().vmem_capacity_bytes)
    except Exception:
        vmem_cap = (64 if "v7" in kind else 128) * 1024 * 1024
    budget = min((vmem_cap * 3) // 4, 96 * 1024 * 1024)
    if "v7" in kind:                       # 64 MiB / TensorCore
        budget = min(budget, 48 * 1024 * 1024)
    if "v5" in kind:
        fused_threshold = 512              # 128-wide MXU: go separable sooner
    elif "v6" in kind:
        fused_threshold = 2048             # HBM-bound: fused FLOPs hide under DMA
    else:
        fused_threshold = 1024             # v7x / unknown
    return int(budget), int(fused_threshold)


def _choose_plane_batch(bc, plane_elems, per_elem_bytes, budget_bytes,
                        fixed_bytes, sublane_align):
    """Planes per grid step: big tiles, >=2 parallel steps, VMEM-budget aware."""
    avail = max(budget_bytes - fixed_bytes - (2 << 20), 1 << 20)
    t = max(1, avail // (per_elem_bytes * plane_elems))
    t = min(t, 512, bc)
    if bc >= 2:
        t = min(t, -(-bc // 2))            # >=2 grid steps -> both v7x TCs
    if t < bc and t >= 8:
        t = (t // 8) * 8                   # sublane-friendly plane batch
    if sublane_align and t < bc and t % 8 != 0:
        # 2-D (planes, HW) layout: block's sublane dim must be 8-aligned or
        # span the whole array; fall back to a single full-extent block if tiny.
        t = 8 if bc > 8 else bc
    return int(max(1, t))


def fft_loss(x, y):
    """mean(|fft2(x) - fft2(y)|) over NCHW inputs — matches torch FFTLoss."""
    assert x.shape == y.shape and x.ndim == 4
    b, c, h, w = map(int, x.shape)
    bc, hw = b * c, h * w
    in_bytes = x.dtype.itemsize

    budget, fused_threshold = _generation_params()
    ch, sh = _dft_cos_sin(h)
    cw, sw = _dft_cos_sin(w)

    # Tiny BC: the separable 3-D layout allows T < 8, so the grid can still
    # span both v7x TensorCores; path choice is perf-irrelevant at that size.
    use_fused = (hw <= fused_threshold) and (bc >= 16)

    out_spec = pl.BlockSpec((8, 128), lambda i: (i, 0))
    cparams = pltpu.CompilerParams(dimension_semantics=("parallel",),
                                   vmem_limit_bytes=int(budget))

    def const_spec(n, m):
        # Constant operand: same block every step -> single-buffer it.
        return pl.BlockSpec((n, m), lambda i: (0, 0),
                            pipeline_mode=pl.Buffered(1))

    if use_fused:
        # Fused path: two (HW, HW) Kronecker DFT matrices, two matmuls/step.
        fixed = 2 * hw * hw * 2                       # bf16, single-buffered
        t = _choose_plane_batch(bc, hw, 40, budget, fixed, sublane_align=True)
        g = int(pl.cdiv(bc, t))
        f2_re = (jnp.kron(ch, cw) - jnp.kron(sh, sw)).astype(jnp.bfloat16)
        f2_im = (jnp.kron(sh, cw) + jnp.kron(ch, sw)).astype(jnp.bfloat16)
        plane_spec = pl.BlockSpec((t, hw), lambda i: (i, 0))
        cost = pl.CostEstimate(
            flops=4 * bc * hw * hw,
            transcendentals=bc * hw,
            bytes_accessed=2 * bc * hw * in_bytes + 2 * hw * hw * 2
            + g * 8 * 128 * 4)
        partials = pl.pallas_call(
            functools.partial(_fft_loss_kernel_fused, bc=bc),
            out_shape=jax.ShapeDtypeStruct((8 * g, 128), jnp.float32),
            grid_spec=pltpu.PrefetchScalarGridSpec(
                num_scalar_prefetch=0,
                grid=(g,),
                in_specs=[plane_spec, plane_spec,
                          const_spec(hw, hw), const_spec(hw, hw)],
                out_specs=out_spec),
            compiler_params=cparams,
            cost_estimate=cost,
        )(x.reshape(bc, hw), y.reshape(bc, hw), f2_re, f2_im)
    else:
        # Separable path: W-DFT then H-DFT, cos/sin as separate operands so the
        # epilogue has no unaligned slices.
        # TODO(synk): for planes whose per-plane working set approaches the
        # VMEM budget the W axis of the intermediates should be tiled too.
        fixed = 2 * (h * h + w * w) * 2
        t = _choose_plane_batch(bc, hw, 64, budget, fixed, sublane_align=False)
        g = int(pl.cdiv(bc, t))
        plane_spec = pl.BlockSpec((t, h, w), lambda i: (i, 0, 0))
        cost = pl.CostEstimate(
            flops=4 * bc * hw * (w + 2 * h),
            transcendentals=bc * hw,
            bytes_accessed=2 * bc * hw * in_bytes + 2 * (h * h + w * w) * 2
            + g * 8 * 128 * 4)
        partials = pl.pallas_call(
            functools.partial(_fft_loss_kernel_separable, bc=bc),
            out_shape=jax.ShapeDtypeStruct((8 * g, 128), jnp.float32),
            grid_spec=pltpu.PrefetchScalarGridSpec(
                num_scalar_prefetch=0,
                grid=(g,),
                in_specs=[plane_spec, plane_spec,
                          const_spec(w, w), const_spec(w, w),
                          const_spec(h, h), const_spec(h, h)],
                out_specs=out_spec),
            compiler_params=cparams,
            cost_estimate=cost,
        )(x.reshape(bc, h, w), y.reshape(bc, h, w),
          cw.astype(jnp.bfloat16), sw.astype(jnp.bfloat16),
          ch.astype(jnp.bfloat16), sh.astype(jnp.bfloat16))

    return jnp.sum(partials) / jnp.float32(bc * hw)


def _reference(x, y):
    return jnp.mean(jnp.abs(jnp.fft.fft2(x) - jnp.fft.fft2(y)))


if __name__ == "__main__":
    key = jax.random.PRNGKey(0)

    # Shapes exercised:
    #   (2, 4, 16, 16): separable kernel, 2 parallel grid steps (primary shape)
    #   (3, 7, 16, 16): fused Kronecker kernel, masked partial tail block
    #   (2, 2, 40, 24): separable kernel, non-square plane
    for shape in ((2, 4, 16, 16), (3, 7, 16, 16), (2, 2, 40, 24)):
        kx, ky, key = jax.random.split(key, 3)
        x = jax.random.normal(kx, shape, dtype=jnp.float32)
        y = jax.random.normal(ky, shape, dtype=jnp.float32)
        loss = jax.block_until_ready(fft_loss(x, y))
        ref = jax.block_until_ready(_reference(x, y))
        assert jnp.allclose(loss, ref, rtol=2e-2, atol=2e-2), (shape, loss, ref)

    print("KERNEL_OK")
</pallas_src>

<mosaic_0001>
module attributes {stable_mosaic.version = 11 : i64} {
  func.func @_fft_loss_kernel_separable(%arg0: i32, %arg1: memref<4x16x16xf32, #tpu.memory_space<vmem>>, %arg2: memref<4x16x16xf32, #tpu.memory_space<vmem>>, %arg3: memref<16x16xbf16, #tpu.memory_space<vmem>>, %arg4: memref<16x16xbf16, #tpu.memory_space<vmem>>, %arg5: memref<16x16xbf16, #tpu.memory_space<vmem>>, %arg6: memref<16x16xbf16, #tpu.memory_space<vmem>>, %arg7: memref<8x128xf32, #tpu.memory_space<vmem>>) attributes {dimension_semantics = [#tpu.dimension_semantics<parallel>], iteration_bounds = array<i64: 2>, scalar_prefetch = 0 : i64, scratch_operands = 0 : i64, tpu.core_type = #tpu.core_type<tc>, window_params = [{transform_indices = @transform_0, window_bounds = array<i64: 4, 16, 16>}, {transform_indices = @transform_1, window_bounds = array<i64: 4, 16, 16>}, {pipeline_mode = #tpu.pipeline_mode<synchronous>, transform_indices = @transform_2, window_bounds = array<i64: 16, 16>}, {pipeline_mode = #tpu.pipeline_mode<synchronous>, transform_indices = @transform_3, window_bounds = array<i64: 16, 16>}, {pipeline_mode = #tpu.pipeline_mode<synchronous>, transform_indices = @transform_4, window_bounds = array<i64: 16, 16>}, {pipeline_mode = #tpu.pipeline_mode<synchronous>, transform_indices = @transform_5, window_bounds = array<i64: 16, 16>}, {transform_indices = @transform_6, window_bounds = array<i64: 8, 128>}]} {
    %c4_i32 = arith.constant 4 : i32
    %0 = arith.muli %arg0, %c4_i32 : i32
    %c8_i32 = arith.constant 8 : i32
    %1 = arith.subi %c8_i32, %0 : i32
    %2 = tpu.iota {dimensions = array<i32: 0>} : vector<4x16x16xi32>
    %3 = vector.broadcast %1 : i32 to vector<4x16x16xi32>
    %4 = arith.cmpi slt, %2, %3 : vector<4x16x16xi32>
    %c0 = arith.constant 0 : index
    %c0_0 = arith.constant 0 : index
    %c0_1 = arith.constant 0 : index
    %5 = vector.load %arg1[%c0, %c0_0, %c0_1] : memref<4x16x16xf32, #tpu.memory_space<vmem>>, vector<4x16x16xf32>
    %c0_2 = arith.constant 0 : index
    %c0_3 = arith.constant 0 : index
    %c0_4 = arith.constant 0 : index
    %6 = vector.load %arg2[%c0_2, %c0_3, %c0_4] : memref<4x16x16xf32, #tpu.memory_space<vmem>>, vector<4x16x16xf32>
    %7 = arith.subf %5, %6 : vector<4x16x16xf32>
    %cst = arith.constant 0.000000e+00 : f32
    %8 = vector.broadcast %cst : f32 to vector<4x16x16xf32>
    %9 = arith.select %4, %7, %8 : vector<4x16x16xi1>, vector<4x16x16xf32>
    %10 = arith.truncf %9 : vector<4x16x16xf32> to vector<4x16x16xbf16>
    %11 = vector.shape_cast %10 : vector<4x16x16xbf16> to vector<64x16xbf16>
    %c0_5 = arith.constant 0 : index
    %c0_6 = arith.constant 0 : index
    %12 = vector.load %arg3[%c0_5, %c0_6] : memref<16x16xbf16, #tpu.memory_space<vmem>>, vector<16x16xbf16>
    %cst_7 = arith.constant dense<0.000000e+00> : vector<64x16xf32>
    %13 = tpu.matmul %11, %12, %cst_7 {dimension_numbers = #tpu.dot_dimension_numbers<[1], [0], [0], [1], [0, 0, 1, 1], [], []>} : vector<64x16xbf16>, vector<16x16xbf16>, vector<64x16xf32> -> vector<64x16xf32>
    %c0_8 = arith.constant 0 : index
    %c0_9 = arith.constant 0 : index
    %14 = vector.load %arg4[%c0_8, %c0_9] : memref<16x16xbf16, #tpu.memory_space<vmem>>, vector<16x16xbf16>
    %cst_10 = arith.constant dense<0.000000e+00> : vector<64x16xf32>
    %15 = tpu.matmul %11, %14, %cst_10 {dimension_numbers = #tpu.dot_dimension_numbers<[1], [0], [0], [1], [0, 0, 1, 1], [], []>} : vector<64x16xbf16>, vector<16x16xbf16>, vector<64x16xf32> -> vector<64x16xf32>
    %16 = arith.truncf %13 : vector<64x16xf32> to vector<64x16xbf16>
    %17 = vector.shape_cast %16 : vector<64x16xbf16> to vector<4x16x16xbf16>
    %18 = tpu.transpose %17, [0, 2, 1] : vector<4x16x16xbf16> -> vector<4x16x16xbf16>
    %19 = vector.shape_cast %18 : vector<4x16x16xbf16> to vector<64x16xbf16>
    %20 = arith.truncf %15 : vector<64x16xf32> to vector<64x16xbf16>
    %21 = vector.shape_cast %20 : vector<64x16xbf16> to vector<4x16x16xbf16>
    %22 = tpu.transpose %21, [0, 2, 1] : vector<4x16x16xbf16> -> vector<4x16x16xbf16>
    %23 = vector.shape_cast %22 : vector<4x16x16xbf16> to vector<64x16xbf16>
    %c0_11 = arith.constant 0 : index
    %c0_12 = arith.constant 0 : index
    %24 = vector.load %arg5[%c0_11, %c0_12] : memref<16x16xbf16, #tpu.memory_space<vmem>>, vector<16x16xbf16>
    %cst_13 = arith.constant dense<0.000000e+00> : vector<64x16xf32>
    %25 = tpu.matmul %19, %24, %cst_13 {dimension_numbers = #tpu.dot_dimension_numbers<[1], [0], [0], [1], [0, 0, 1, 1], [], []>} : vector<64x16xbf16>, vector<16x16xbf16>, vector<64x16xf32> -> vector<64x16xf32>
    %c0_14 = arith.constant 0 : index
    %c0_15 = arith.constant 0 : index
    %26 = vector.load %arg6[%c0_14, %c0_15] : memref<16x16xbf16, #tpu.memory_space<vmem>>, vector<16x16xbf16>
    %cst_16 = arith.constant dense<0.000000e+00> : vector<64x16xf32>
    %27 = tpu.matmul %19, %26, %cst_16 {dimension_numbers = #tpu.dot_dimension_numbers<[1], [0], [0], [1], [0, 0, 1, 1], [], []>} : vector<64x16xbf16>, vector<16x16xbf16>, vector<64x16xf32> -> vector<64x16xf32>
    %c0_17 = arith.constant 0 : index
    %c0_18 = arith.constant 0 : index
    %28 = vector.load %arg5[%c0_17, %c0_18] : memref<16x16xbf16, #tpu.memory_space<vmem>>, vector<16x16xbf16>
    %cst_19 = arith.constant dense<0.000000e+00> : vector<64x16xf32>
    %29 = tpu.matmul %23, %28, %cst_19 {dimension_numbers = #tpu.dot_dimension_numbers<[1], [0], [0], [1], [0, 0, 1, 1], [], []>} : vector<64x16xbf16>, vector<16x16xbf16>, vector<64x16xf32> -> vector<64x16xf32>
    %c0_20 = arith.constant 0 : index
    %c0_21 = arith.constant 0 : index
    %30 = vector.load %arg6[%c0_20, %c0_21] : memref<16x16xbf16, #tpu.memory_space<vmem>>, vector<16x16xbf16>
    %cst_22 = arith.constant dense<0.000000e+00> : vector<64x16xf32>
    %31 = tpu.matmul %23, %30, %cst_22 {dimension_numbers = #tpu.dot_dimension_numbers<[1], [0], [0], [1], [0, 0, 1, 1], [], []>} : vector<64x16xbf16>, vector<16x16xbf16>, vector<64x16xf32> -> vector<64x16xf32>
    %32 = arith.subf %25, %31 : vector<64x16xf32>
    %33 = arith.addf %27, %29 : vector<64x16xf32>
    %34 = arith.mulf %32, %32 : vector<64x16xf32>
    %35 = arith.mulf %33, %33 : vector<64x16xf32>
    %36 = arith.addf %34, %35 : vector<64x16xf32>
    %37 = math.sqrt %36 : vector<64x16xf32>
    %38 = vector.shape_cast %37 : vector<64x16xf32> to vector<1x64x16xf32>
    %cst_23 = arith.constant dense<0.000000e+00> : vector<1xf32>
    %39 = vector.multi_reduction <add>, %38, %cst_23 [1, 2] : vector<1x64x16xf32> to vector<1xf32>
    %40 = vector.shape_cast %39 : vector<1xf32> to vector<1x1x1xf32>
    %41 = vector.extract %40[0, 0, 0] : f32 from vector<1x1x1xf32>
    %42 = tpu.iota {dimensions = array<i32: 0>} : vector<8x128xi32>
    %43 = tpu.iota {dimensions = array<i32: 1>} : vector<8x128xi32>
    %c0_i32 = arith.constant 0 : i32
    %44 = vector.broadcast %c0_i32 : i32 to vector<8x128xi32>
    %45 = arith.cmpi eq, %42, %44 : vector<8x128xi32>
    %c0_i32_24 = arith.constant 0 : i32
    %46 = vector.broadcast %c0_i32_24 : i32 to vector<8x128xi32>
    %47 = arith.cmpi eq, %43, %46 : vector<8x128xi32>
    %48 = arith.andi %45, %47 : vector<8x128xi1>
    %cst_25 = arith.constant 0.000000e+00 : f32
    %49 = vector.broadcast %41 : f32 to vector<8x128xf32>
    %50 = vector.broadcast %cst_25 : f32 to vector<8x128xf32>
    %51 = arith.select %48, %49, %50 : vector<8x128xi1>, vector<8x128xf32>
    %c0_26 = arith.constant 0 : index
    %c0_27 = arith.constant 0 : index
    %52 = vector.load %arg7[%c0_26, %c0_27] : memref<8x128xf32, #tpu.memory_space<vmem>>, vector<8x128xf32>
    tpu.vector_store %arg7[%c0_26, %c0_27], %51 {strides = array<i32>} : memref<8x128xf32, #tpu.memory_space<vmem>>, vector<8x128xf32>,
    return
  }
  func.func @transform_0(%arg0: i32) -> (i32, i32, i32) {
    %c0_i32 = arith.constant 0 : i32
    %c0_i32_0 = arith.constant 0 : i32
    %c0_i32_1 = arith.constant 0 : i32
    return %arg0, %c0_i32, %c0_i32_0 : i32, i32, i32
  }
  func.func @transform_1(%arg0: i32) -> (i32, i32, i32) {
    %c0_i32 = arith.constant 0 : i32
    %c0_i32_0 = arith.constant 0 : i32
    %c0_i32_1 = arith.constant 0 : i32
    return %arg0, %c0_i32, %c0_i32_0 : i32, i32, i32
  }
  func.func @transform_2(%arg0: i32) -> (i32, i32) {
    %c0_i32 = arith.constant 0 : i32
    %c0_i32_0 = arith.constant 0 : i32
    %c0_i32_1 = arith.constant 0 : i32
    return %c0_i32, %c0_i32_0 : i32, i32
  }
  func.func @transform_3(%arg0: i32) -> (i32, i32) {
    %c0_i32 = arith.constant 0 : i32
    %c0_i32_0 = arith.constant 0 : i32
    %c0_i32_1 = arith.constant 0 : i32
    return %c0_i32, %c0_i32_0 : i32, i32
  }
  func.func @transform_4(%arg0: i32) -> (i32, i32) {
    %c0_i32 = arith.constant 0 : i32
    %c0_i32_0 = arith.constant 0 : i32
    %c0_i32_1 = arith.constant 0 : i32
    return %c0_i32, %c0_i32_0 : i32, i32
  }
  func.func @transform_5(%arg0: i32) -> (i32, i32) {
    %c0_i32 = arith.constant 0 : i32
    %c0_i32_0 = arith.constant 0 : i32
    %c0_i32_1 = arith.constant 0 : i32
    return %c0_i32, %c0_i32_0 : i32, i32
  }
  func.func @transform_6(%arg0: i32) -> (i32, i32) {
    %c0_i32 = arith.constant 0 : i32
    %c0_i32_0 = arith.constant 0 : i32
    return %arg0, %c0_i32 : i32, i32
  }
}

</mosaic_0001>

<llo_original>
// kernel: tpu_custom_call.1
$region0: #{tpu_custom_call.1}
  #allocation0 [shape = 'u32[]', space=smem, size = 0x4, offset = 0x4, fixed_abs, tag = 'smem constant byte address 0x4 - core index']
  #allocation1 [shape = 'u32[144,128]{1,0:T(1,128)}', space=vmem, size = 0x12000, scoped, tag = 'internal scratch']
  %s0 = inlined_call_operand.hbm [shape: f32[8,16,16], index: 0, kind: input, shape index: {}]
  %s1 = inlined_call_operand.hbm [shape: f32[8,16,16], index: 1, kind: input, shape index: {}]
  %s2 = inlined_call_operand.hbm [shape: bf16[16,16], index: 2, kind: input, shape index: {}]
  %s3 = inlined_call_operand.hbm [shape: bf16[16,16], index: 3, kind: input, shape index: {}]
  %s4 = inlined_call_operand.hbm [shape: bf16[16,16], index: 4, kind: input, shape index: {}]
  %s5 = inlined_call_operand.hbm [shape: bf16[16,16], index: 5, kind: input, shape index: {}]
  %s6 = inlined_call_operand.hbm [shape: f32[16,128], index: 6, kind: output, shape index: {}]
  %s7 = sld [smem:[#allocation0]]
  $region81: #{tpu_custom_call.1} parent=0
    _
  %s9 = ssub.s32 1, %s7
  %s10 = scalar_select 0, %s9, %s7
  $region1: #{tpu_custom_call.1} parent=0
    #allocation2 [shape = 'u8[65536]{0}', space=vmem, size = 0x10000, scoped, tag = 'input window, operand 0']
    #allocation3 [shape = 's32[2]{0}', space=sflag, size = 0x8, scoped, tag = 'scoped memory for tpu_custom_call.1']
    #allocation4 [shape = 's32[2]{0}', space=sflag, size = 0x8, scoped, tag = 'scoped memory for tpu_custom_call.1']
    #allocation5 [shape = 'u8[65536]{0}', space=vmem, size = 0x10000, scoped, tag = 'input window, operand 1']
    #allocation6 [shape = 's32[2]{0}', space=sflag, size = 0x8, scoped, tag = 'scoped memory for tpu_custom_call.1']
    #allocation7 [shape = 'u8[4096]{0}', space=vmem, size = 0x1000, scoped, tag = 'input window, operand 2, single buffered']
    #allocation8 [shape = 'u8[4096]{0}', space=vmem, size = 0x1000, scoped, tag = 'input window, operand 3, single buffered']
    #allocation9 [shape = 's32[1]{0}', space=sflag, size = 0x4, scoped, tag = 'scoped memory for tpu_custom_call.1']
    #allocation10 [shape = 'u8[4096]{0}', space=vmem, size = 0x1000, scoped, tag = 'input window, operand 4, single buffered']
    #allocation11 [shape = 'u8[4096]{0}', space=vmem, size = 0x1000, scoped, tag = 'input window, operand 5, single buffered']
    #allocation12 [shape = 's32[1]{0}', space=sflag, size = 0x4, scoped, tag = 'scoped memory for tpu_custom_call.1']
    #allocation13 [shape = 'u8[8192]{0}', space=vmem, size = 0x2000, scoped, tag = 'output window, operand 0']
    %11 = vsyncpa [#allocation3], 0
    %s12 = scalar_lea.sflag [#allocation3], 1
    %13 = vsyncpa %s12, 0
    %14 = vsyncpa [#allocation6], 0
    %s15 = scalar_lea.sflag [#allocation6], 1
    %16 = vsyncpa %s15, 0
    %17 = vsyncpa [#allocation9], 0
    %18 = vsyncpa [#allocation12], 0
    %19 = vsyncpa [#allocation4], 0
    %s20 = scalar_lea.sflag [#allocation4], 1
    %21 = vsyncpa %s20, 0
    loop: start=0, step=1, limit=4
    $region2: #{tpu_custom_call.1} parent=1 // loop_pre_header
      _
    $region3: #{tpu_custom_call.1} parent=1 // loop_header
      %s23 = sphi 0, %s27
      %p24 = scmp.ge.s32.totalorder %s23, 4
      %s33 = sphi 0, %s35
      %s36 = sphi 0, %s33
      %s37 = sphi 0, %s36
      %s53 = sphi 0, %s37
      %s59 = sphi 0, %s61
      %s62 = sphi 0, %s59
      %s63 = sphi 0, %s62
      %s79 = sphi 0, %s63
      %s83 = sphi 0, %s83
      %s85 = sphi 0, %s83
      %s86 = sphi 0, %s85
      %s100 = sphi 0, %s86
      %s104 = sphi 0, %s104
      %s106 = sphi 0, %s104
      %s107 = sphi 0, %s106
      %s121 = sphi 0, %s107
      %s125 = sphi 0, %s125
      %s127 = sphi 0, %s125
      %s128 = sphi 0, %s127
      %s142 = sphi 0, %s128
      %s146 = sphi 0, %s146
      %s148 = sphi 0, %s146
      %s149 = sphi 0, %s148
      %s163 = sphi 0, %s149
      %s169 = sphi 0, %s171
      %s172 = sphi 0, %s169
      %s173 = sphi 0, %s172
      %s189 = sphi 0, %s173
    $region4: #{tpu_custom_call.1} parent=1 // loop_header_branch
      %26 = sbr.rel (%p24) target = $region8
    $region5: #{tpu_custom_call.1} parent=1 // loop_body
      %s28 = ssub.s32 %s23, 1
      %s29 = ssub.s32 %s23, 2
      %s30 = sadd.s32 %s23, 1
      %s31 = ssub.s32 %s23, %s30
      %p32 = scmp.eq.s32.totalorder %s31, 0
      %s34 = sadd.s32 %s33, 1
      %s35 = scalar_select %p32, %s33, %s34
      %p38 = pneg %p32
      %p39 = scmp.eq.s32.totalorder %s23, 1
      %p40 = por %p38, %p39
      %p41 = scmp.ne.s32.totalorder %s33, %s36
      %p42 = scmp.eq.s32.totalorder %s23, 0
      %p43 = por %p41, %p42
      %p44 = scmp.ne.s32.totalorder %s33, %s36
      %p45 = scmp.eq.s32.totalorder %s28, 1
      %p46 = por %p44, %p45
      %p47 = scmp.ne.s32.totalorder %s36, %s37
      %p48 = scmp.eq.s32.totalorder %s28, 0
      %p49 = por %p47, %p48
      %p50 = scmp.ne.s32.totalorder %s36, %s37
      %p51 = scmp.eq.s32.totalorder %s29, 1
      %p52 = por %p50, %p51
      %p54 = scmp.ne.s32.totalorder %s37, %s53
      %p55 = scmp.eq.s32.totalorder %s29, 0
      %p56 = por %p54, %p55
      %s57 = ssub.s32 %s23, %s30
      %p58 = scmp.eq.s32.totalorder %s57, 0
      %s60 = sadd.s32 %s59, 1
      %s61 = scalar_select %p58, %s59, %s60
      %p64 = pneg %p58
      %p65 = scmp.eq.s32.totalorder %s23, 1
      %p66 = por %p64, %p65
      %p67 = scmp.ne.s32.totalorder %s59, %s62
      %p68 = scmp.eq.s32.totalorder %s23, 0
      %p69 = por %p67, %p68
      %p70 = scmp.ne.s32.totalorder %s59, %s62
      %p71 = scmp.eq.s32.totalorder %s28, 1
      %p72 = por %p70, %p71
      %p73 = scmp.ne.s32.totalorder %s62, %s63
      %p74 = scmp.eq.s32.totalorder %s28, 0
      %p75 = por %p73, %p74
      %p76 = scmp.ne.s32.totalorder %s62, %s63
      %p77 = scmp.eq.s32.totalorder %s29, 1
      %p78 = por %p76, %p77
      %p80 = scmp.ne.s32.totalorder %s63, %s79
      %p81 = scmp.eq.s32.totalorder %s29, 0
      %p82 = por %p80, %p81
      %s84 = sadd.s32 %s83, 1
      %p87 = scmp.eq.s32.totalorder %s23, 1
      %p88 = scmp.ne.s32.totalorder %s83, %s85
      %p89 = scmp.eq.s32.totalorder %s23, 0
      %p90 = por %p88, %p89
      %p91 = scmp.ne.s32.totalorder %s83, %s85
      %p92 = scmp.eq.s32.totalorder %s28, 1
      %p93 = por %p91, %p92
      %p94 = scmp.ne.s32.totalorder %s85, %s86
      %p95 = scmp.eq.s32.totalorder %s28, 0
      %p96 = por %p94, %p95
      %p97 = scmp.ne.s32.totalorder %s85, %s86
      %p98 = scmp.eq.s32.totalorder %s29, 1
      %p99 = por %p97, %p98
      %p101 = scmp.ne.s32.totalorder %s86, %s100
      %p102 = scmp.eq.s32.totalorder %s29, 0
      %p103 = por %p101, %p102
      %s105 = sadd.s32 %s104, 1
      %p108 = scmp.eq.s32.totalorder %s23, 1
      %p109 = scmp.ne.s32.totalorder %s104, %s106
      %p110 = scmp.eq.s32.totalorder %s23, 0
      %p111 = por %p109, %p110
      %p112 = scmp.ne.s32.totalorder %s104, %s106
      %p113 = scmp.eq.s32.totalorder %s28, 1
      %p114 = por %p112, %p113
      %p115 = scmp.ne.s32.totalorder %s106, %s107
      %p116 = scmp.eq.s32.totalorder %s28, 0
      %p117 = por %p115, %p116
      %p118 = scmp.ne.s32.totalorder %s106, %s107
      %p119 = scmp.eq.s32.totalorder %s29, 1
      %p120 = por %p118, %p119
      %p122 = scmp.ne.s32.totalorder %s107, %s121
      %p123 = scmp.eq.s32.totalorder %s29, 0
      %p124 = por %p122, %p123
      %s126 = sadd.s32 %s125, 1
      %p129 = scmp.eq.s32.totalorder %s23, 1
      %p130 = scmp.ne.s32.totalorder %s125, %s127
      %p131 = scmp.eq.s32.totalorder %s23, 0
      %p132 = por %p130, %p131
      %p133 = scmp.ne.s32.totalorder %s125, %s127
      %p134 = scmp.eq.s32.totalorder %s28, 1
      %p135 = por %p133, %p134
      %p136 = scmp.ne.s32.totalorder %s127, %s128
      %p137 = scmp.eq.s32.totalorder %s28, 0
      %p138 = por %p136, %p137
      %p139 = scmp.ne.s32.totalorder %s127, %s128
      %p140 = scmp.eq.s32.totalorder %s29, 1
      %p141 = por %p139, %p140
      %p143 = scmp.ne.s32.totalorder %s128, %s142
      %p144 = scmp.eq.s32.totalorder %s29, 0
      %p145 = por %p143, %p144
      %s147 = sadd.s32 %s146, 1
      %p150 = scmp.eq.s32.totalorder %s23, 1
      %p151 = scmp.ne.s32.totalorder %s146, %s148
      %p152 = scmp.eq.s32.totalorder %s23, 0
      %p153 = por %p151, %p152
      %p154 = scmp.ne.s32.totalorder %s146, %s148
      %p155 = scmp.eq.s32.totalorder %s28, 1
      %p156 = por %p154, %p155
      %p157 = scmp.ne.s32.totalorder %s148, %s149
      %p158 = scmp.eq.s32.totalorder %s28, 0
      %p159 = por %p157, %p158
      %p160 = scmp.ne.s32.totalorder %s148, %s149
      %p161 = scmp.eq.s32.totalorder %s29, 1
      %p162 = por %p160, %p161
      %p164 = scmp.ne.s32.totalorder %s149, %s163
      %p165 = scmp.eq.s32.totalorder %s29, 0
      %p166 = por %p164, %p165
      %s167 = ssub.s32 %s23, %s30
      %p168 = scmp.eq.s32.totalorder %s167, 0
      %s170 = sadd.s32 %s169, 1
      %s171 = scalar_select %p168, %s169, %s170
      %p174 = pneg %p168
      %p175 = scmp.eq.s32.totalorder %s23, 1
      %p176 = por %p174, %p175
      %p177 = scmp.ne.s32.totalorder %s169, %s172
      %p178 = scmp.eq.s32.totalorder %s23, 0
      %p179 = por %p177, %p178
      %p180 = scmp.ne.s32.totalorder %s169, %s172
      %p181 = scmp.eq.s32.totalorder %s28, 1
      %p182 = por %p180, %p181
      %p183 = scmp.ne.s32.totalorder %s172, %s173
      %p184 = scmp.eq.s32.totalorder %s28, 0
      %p185 = por %p183, %p184
      %p186 = scmp.ne.s32.totalorder %s172, %s173
      %p187 = scmp.eq.s32.totalorder %s29, 1
      %p188 = por %p186, %p187
      %p190 = scmp.ne.s32.totalorder %s173, %s189
      %p191 = scmp.eq.s32.totalorder %s29, 0
      %p192 = por %p190, %p191
      %p193 = scmp.le.s32.totalorder 1, %s23
      %p194 = scmp.lt.s32.totalorder %s23, 3
      %p195 = pnand %p193, %p194
      %p196 = pneg %p195
      // Predicated region
      $region9: #{tpu_custom_call.1} parent=5 // pred_check
        _
      $region10: #{tpu_custom_call.1} parent=5 // pred_check_branch
        %198 = sbr.rel (%p195) target = $region12
      $region11: #{tpu_custom_call.1} parent=5 // pred_region
        %s199 = ssub.s32 %s23, 1
        // Predicated region
        $region13: #{tpu_custom_call.1} parent=11 // pred_check
          %p200 = pneg %p96
        $region14: #{tpu_custom_call.1} parent=11 // pred_check_branch
          %202 = sbr.rel (%p200) target = $region16
        $region15: #{tpu_custom_call.1} parent=11 // pred_region
          %s204 = ssub.s32 128, 128
          %205 = vsyncadd [#allocation6], %s204
          %s206 = sshll.u32 [#allocation7], 4
          %s207 = int_to_ptr.vmem [resolvable:$true] %s206
          %212 = dma.hbm_to_vmem [thread:$0]  %s2, 128, %s207, [#allocation6], 64, 64, 4
        $region16: #{tpu_custom_call.1} parent=11 // pred_fallthru
          _
        // Predicated region
        $region17: #{tpu_custom_call.1} parent=11 // pred_check
          %p213 = pneg %p117
        $region18: #{tpu_custom_call.1} parent=11 // pred_check_branch
          %215 = sbr.rel (%p213) target = $region20
        $region19: #{tpu_custom_call.1} parent=11 // pred_region
          %s217 = ssub.s32 128, 128
          %218 = vsyncadd [#allocation9], %s217
          %s219 = sshll.u32 [#allocation8], 4
          %s220 = int_to_ptr.vmem [resolvable:$true] %s219
          %225 = dma.hbm_to_vmem [thread:$0]  %s3, 128, %s220, [#allocation9], 64, 64, 4
        $region20: #{tpu_custom_call.1} parent=11 // pred_fallthru
          _
        // Predicated region
        $region21: #{tpu_custom_call.1} parent=11 // pred_check
          %p226 = pneg %p138
        $region22: #{tpu_custom_call.1} parent=11 // pred_check_branch
          %228 = sbr.rel (%p226) target = $region24
        $region23: #{tpu_custom_call.1} parent=11 // pred_region
          %s230 = ssub.s32 128, 128
          %231 = vsyncadd [#allocation9], %s230
          %s232 = sshll.u32 [#allocation10], 4
          %s233 = int_to_ptr.vmem [resolvable:$true] %s232
          %238 = dma.hbm_to_vmem [thread:$0]  %s4, 128, %s233, [#allocation9], 64, 64, 4
        $region24: #{tpu_custom_call.1} parent=11 // pred_fallthru
          _
        // Predicated region
        $region25: #{tpu_custom_call.1} parent=11 // pred_check
          %p239 = pneg %p159
        $region26: #{tpu_custom_call.1} parent=11 // pred_check_branch
          %241 = sbr.rel (%p239) target = $region28
        $region27: #{tpu_custom_call.1} parent=11 // pred_region
          %s243 = ssub.s32 128, 128
          %244 = vsyncadd [#allocation12], %s243
          %s245 = sshll.u32 [#allocation11], 4
          %s246 = int_to_ptr.vmem [resolvable:$true] %s245
          %251 = dma.hbm_to_vmem [thread:$0]  %s5, 128, %s246, [#allocation12], 64, 64, 4
        $region28: #{tpu_custom_call.1} parent=11 // pred_fallthru
          _
      $region12: #{tpu_custom_call.1} parent=5 // pred_fallthru
        _
      %p252 = scmp.lt.s32.totalorder %s23, 2
      // Predicated region
      $region29: #{tpu_custom_call.1} parent=5 // pred_check
        %p253 = pneg %p252
      $region30: #{tpu_custom_call.1} parent=5 // pred_check_branch
        %255 = sbr.rel (%p253) target = $region32
      $region31: #{tpu_custom_call.1} parent=5 // pred_region
        // Predicated region
        $region33: #{tpu_custom_call.1} parent=31 // pred_check
          %p256 = pneg %p43
        $region34: #{tpu_custom_call.1} parent=31 // pred_check_branch
          %258 = sbr.rel (%p256) target = $region36
        $region35: #{tpu_custom_call.1} parent=31 // pred_region
          %s259 = sand.u32 %s33, 1
          %s260 = scalar_lea.sflag [#allocation3], %s259
          %s261 = sand.u32 %s33, 1
          %s262 = smul.addr %s261, 64
          %s263 = scalar_lea.vmem [#allocation2], %s262
          %s264 = smul.u32 4, %s23
          %s266 = ssub.s32 1024, 1024
          %267 = vsyncadd %s260, %s266
          %s268 = smul.addr %s264, 2
          %s269 = smul.addr %s268, 128
          %s270 = scalar_lea.hbm %s0, %s269
          %s271 = sshll.u32 %s263, 4
          %s272 = int_to_ptr.vmem [resolvable:$true] %s271
          %277 = dma.hbm_to_vmem [thread:$0]  %s270, 1024, %s272, %s260, 128, 128, 8
        $region36: #{tpu_custom_call.1} parent=31 // pred_fallthru
          _
        // Predicated region
        $region37: #{tpu_custom_call.1} parent=31 // pred_check
          %p278 = pneg %p69
        $region38: #{tpu_custom_call.1} parent=31 // pred_check_branch
          %280 = sbr.rel (%p278) target = $region40
        $region39: #{tpu_custom_call.1} parent=31 // pred_region
          %s281 = sand.u32 %s23, 1
          %s282 = scalar_lea.sflag [#allocation6], %s281
          %s283 = sand.u32 %s59, 1
          %s284 = smul.addr %s283, 64
          %s285 = scalar_lea.vmem [#allocation5], %s284
          %s286 = smul.u32 4, %s23
          %s288 = ssub.s32 1024, 1024
          %289 = vsyncadd %s282, %s288
          %s290 = smul.addr %s286, 2
          %s291 = smul.addr %s290, 128
          %s292 = scalar_lea.hbm %s1, %s291
          %s293 = sshll.u32 %s285, 4
          %s294 = int_to_ptr.vmem [resolvable:$true] %s293
          %299 = dma.hbm_to_vmem [thread:$0]  %s292, 1024, %s294, %s282, 128, 128, 8
        $region40: #{tpu_custom_call.1} parent=31 // pred_fallthru
          _
      $region32: #{tpu_custom_call.1} parent=5 // pred_fallthru
        _
      %p300 = scmp.le.s32.totalorder 1, %s23
      %p301 = scmp.lt.s32.totalorder %s23, 3
      %p302 = pnand %p300, %p301
      %p303 = pneg %p302
      // Predicated region
      $region41: #{tpu_custom_call.1} parent=5 // pred_check
        _
      $region42: #{tpu_custom_call.1} parent=5 // pred_check_branch
        %305 = sbr.rel (%p302) target = $region44
      $region43: #{tpu_custom_call.1} parent=5 // pred_region
        %s306 = ssub.s32 %s23, 1
        %s307 = sand.u32 %s36, 1
        %s308 = scalar_lea.sflag [#allocation3], %s307
        %s309 = sand.u32 %s36, 1
        %s310 = smul.addr %s309, 64
        %s311 = scalar_lea.vmem [#allocation2], %s310
        // Predicated region
        $region45: #{tpu_custom_call.1} parent=43 // pred_check
          %p312 = pneg %p49
        $region46: #{tpu_custom_call.1} parent=43 // pred_check_branch
          %314 = sbr.rel (%p312) target = $region48
        $region47: #{tpu_custom_call.1} parent=43 // pred_region
          %315 = dma.done %s308, 1024
        $region48: #{tpu_custom_call.1} parent=43 // pred_fallthru
          _
        %s316 = sand.u32 %s28, 1
        %s317 = scalar_lea.sflag [#allocation6], %s316
        %s318 = sand.u32 %s62, 1
        %s319 = smul.addr %s318, 64
        %s320 = scalar_lea.vmem [#allocation5], %s319
        // Predicated region
        $region49: #{tpu_custom_call.1} parent=43 // pred_check
          %p321 = pneg %p75
        $region50: #{tpu_custom_call.1} parent=43 // pred_check_branch
          %323 = sbr.rel (%p321) target = $region52
        $region51: #{tpu_custom_call.1} parent=43 // pred_region
          %324 = dma.done %s317, 1024
        $region52: #{tpu_custom_call.1} parent=43 // pred_fallthru
          _
        // Predicated region
        $region53: #{tpu_custom_call.1} parent=43 // pred_check
          %p325 = pneg %p96
        $region54: #{tpu_custom_call.1} parent=43 // pred_check_branch
          %327 = sbr.rel (%p325) target = $region56
        $region55: #{tpu_custom_call.1} parent=43 // pred_region
          %328 = dma.done [#allocation6], 128
        $region56: #{tpu_custom_call.1} parent=43 // pred_fallthru
          _
        // Predicated region
        $region57: #{tpu_custom_call.1} parent=43 // pred_check
          %p329 = pneg %p117
        $region58: #{tpu_custom_call.1} parent=43 // pred_check_branch
          %331 = sbr.rel (%p329) target = $region60
        $region59: #{tpu_custom_call.1} parent=43 // pred_region
          %332 = dma.done [#allocation9], 128
        $region60: #{tpu_custom_call.1} parent=43 // pred_fallthru
          _
        // Predicated region
        $region61: #{tpu_custom_call.1} parent=43 // pred_check
          %p333 = pneg %p138
        $region62: #{tpu_custom_call.1} parent=43 // pred_check_branch
          %335 = sbr.rel (%p333) target = $region64
        $region63: #{tpu_custom_call.1} parent=43 // pred_region
          %336 = dma.done [#allocation9], 128
        $region64: #{tpu_custom_call.1} parent=43 // pred_fallthru
          _
        // Predicated region
        $region65: #{tpu_custom_call.1} parent=43 // pred_check
          %p337 = pneg %p159
        $region66: #{tpu_custom_call.1} parent=43 // pred_check_branch
          %339 = sbr.rel (%p337) target = $region68
        $region67: #{tpu_custom_call.1} parent=43 // pred_region
          %340 = dma.done [#allocation12], 128
        $region68: #{tpu_custom_call.1} parent=43 // pred_fallthru
          _
        %s341 = sand.u32 %s36, 1
        %s342 = scalar_lea.sflag [#allocation3], %s341
        %s343 = sand.u32 %s36, 1
        %s344 = smul.addr %s343, 64
        %s345 = scalar_lea.vmem [#allocation2], %s344
        %p346 = pneg %p49
        %p347 = pneg %p46
        %s348 = sand.u32 %s28, 1
        %s349 = scalar_lea.sflag [#allocation6], %s348
        %s350 = sand.u32 %s62, 1
        %s351 = smul.addr %s350, 64
        %s352 = scalar_lea.vmem [#allocation5], %s351
        %p353 = pneg %p75
        %p354 = pneg %p72
        %p355 = pneg %p96
        %p356 = pneg %p93
        %p357 = pneg %p117
        %p358 = pneg %p114
        %p359 = pneg %p138
        %p360 = pneg %p135
        %p361 = pneg %p159
        %p362 = pneg %p156
        %p363 = pneg %p185
        %p364 = pneg %p182
        %s365 = sand.u32 %s172, 1
        %s366 = scalar_lea.sflag [#allocation4], %s365
        %s367 = sand.u32 %s172, 1
        %s368 = smul.addr %s367, 8
        %s369 = scalar_lea.vmem [#allocation13], %s368
        %s370 = smul.u32 4, %s28
        %s371 = smul.u32 4, %s28
        %s373 = smul.u32 %s28, 4
        %s374 = ssub.s32 8, %s373
        %v375 = vstv %s374
        %vm376 = vcmp.gt.s32.totalorder %v375, 0
        %vm377 = vcmp.gt.s32.totalorder %v375, 1
        %vm378 = vcmp.gt.s32.totalorder %v375, 2
        %vm379 = vcmp.gt.s32.totalorder %v375, 3
        %v380 = vld [vmem:[%s311] sm:$0xff]
        %v381 = vld [vmem:[%s311 + $0x8] sm:$0xff]
        %v382 = vld [vmem:[%s311 + $0x10] sm:$0xff]
        %v383 = vld [vmem:[%s311 + $0x18] sm:$0xff]
        %v384 = vld [vmem:[%s311 + $0x20] sm:$0xff]
        %v385 = vld [vmem:[%s311 + $0x28] sm:$0xff]
        %v386 = vld [vmem:[%s311 + $0x30] sm:$0xff]
        %v387 = vld [vmem:[%s311 + $0x38] sm:$0xff]
        %v388 = vld [vmem:[%s320] sm:$0xff]
        %v389 = vld [vmem:[%s320 + $0x8] sm:$0xff]
        %v390 = vld [vmem:[%s320 + $0x10] sm:$0xff]
        %v391 = vld [vmem:[%s320 + $0x18] sm:$0xff]
        %v392 = vld [vmem:[%s320 + $0x20] sm:$0xff]
        %v393 = vld [vmem:[%s320 + $0x28] sm:$0xff]
        %v394 = vld [vmem:[%s320 + $0x30] sm:$0xff]
        %v395 = vld [vmem:[%s320 + $0x38] sm:$0xff]
        %v396 = vsub.f32 %v380, %v388
        %v397 = vsub.f32 %v381, %v389
        %v398 = vsub.f32 %v382, %v390
        %v399 = vsub.f32 %v383, %v391
        %v400 = vsub.f32 %v384, %v392
        %v401 = vsub.f32 %v385, %v393
        %v402 = vsub.f32 %v386, %v394
        %v403 = vsub.f32 %v387, %v395
        %v404 = vsel %vm376, %v396, 0.0
        %v405 = vsel %vm376, %v397, 0.0
        %v406 = vsel %vm377, %v398, 0.0
        %v407 = vsel %vm377, %v399, 0.0
        %v408 = vsel %vm378, %v400, 0.0
        %v409 = vsel %vm378, %v401, 0.0
        %v410 = vsel %vm379, %v402, 0.0
        %v411 = vsel %vm379, %v403, 0.0
        %v412 = vpack.c.bf16 %v405, %v404
        %v413 = vpack.c.bf16 %v407, %v406
        %v414 = vpack.c.bf16 %v409, %v408
        %v415 = vpack.c.bf16 %v411, %v410
        %v416 = vld [vmem:[#allocation7] sm:$0xf]
        %v417 = vld [vmem:[#allocation7 + $0x4] sm:$0xf]
        %v420 = vunpack.c.l.b16 %v416
        %v421 = vunpack.c.l.b16 %v417
        %v422 = vpack.c.b16 %v421, %v420
        %vm424 = vcmask 130048
        %v426 = vsel %vm424, %v412, 0
        %v429 = vsel %vm424, %v413, 0
        %v432 = vsel %vm424, %v414, 0
        %v435 = vsel %vm424, %v415, 0
        %437 = vmatprep.subr.bf16.mxu0 0
        %438 = vmatpush1.bf16.msra.mxu0 %v422
        %439 = vmatprep.subr.bf16.mxu0 0
        %440 = vmatpush1.bf16.msra.mxu0 0
        %441 = vmatprep.subr.bf16.mxu0 0
        %442 = vmatpush1.bf16.msra.mxu0 0
        %443 = vmatprep.subr.bf16.mxu0 0
        %444 = vmatpush1.bf16.msra.mxu0 0
        %445 = vmatprep.subr.bf16.mxu0 0
        %446 = vmatpush1.bf16.msra.mxu0 0
        %447 = vmatprep.subr.bf16.mxu0 0
        %448 = vmatpush1.bf16.msra.mxu0 0
        %449 = vmatprep.subr.bf16.mxu0 0
        %450 = vmatpush1.bf16.msra.mxu0 0
        %451 = vmatprep.subr.bf16.mxu0 0
        %452 = vmatpush1.bf16.msra.mxu0 0
        %453 = vmatprep.subr.bf16.mxu0 0
        %454 = vmatpush1.bf16.msra.mxu0 0
        %455 = vmatprep.subr.bf16.mxu0 0
        %456 = vmatpush1.bf16.msra.mxu0 0
        %457 = vmatprep.subr.bf16.mxu0 0
        %458 = vmatpush1.bf16.msra.mxu0 0
        %459 = vmatprep.subr.bf16.mxu0 0
        %460 = vmatpush1.bf16.msra.mxu0 0
        %461 = vmatprep.subr.bf16.mxu0 0
        %462 = vmatpush1.bf16.msra.mxu0 0
        %463 = vmatprep.subr.bf16.mxu0 0
        %464 = vmatpush1.bf16.msra.mxu0 0
        %465 = vmatprep.subr.bf16.mxu0 0
        %466 = vmatpush1.bf16.msra.mxu0 0
        %467 = vmatprep.subr.bf16.mxu0 0
        %468 = vmatpush1.bf16.msra.mxu0 0
        %469 = vmatprep.mubr.bf16.mxu0 0
        %470 = vmatmul.mubr.bf16.gmra.mrb[0].mxu0 %v426
        %v471 = vpop.f32.mrb[0].mxu0
        %v472 = vadd.f32 0.0, %v471
        %v473 = vpop.f32.mrb[0].mxu0
        %v474 = vpop.f32.mrb[0].mxu0
        %v475 = vadd.f32 0.0, %v474
        %v476 = vpop.f32.mrb[0].mxu0
        %477 = vmatprep.mubr.bf16.mxu0 0
        %478 = vmatmul.mubr.bf16.gmra.mrb[0].mxu0 %v429
        %v479 = vpop.f32.mrb[0].mxu0
        %v480 = vadd.f32 0.0, %v479
        %v481 = vpop.f32.mrb[0].mxu0
        %v482 = vpop.f32.mrb[0].mxu0
        %v483 = vadd.f32 0.0, %v482
        %v484 = vpop.f32.mrb[0].mxu0
        %485 = vmatprep.mubr.bf16.mxu0 0
        %486 = vmatmul.mubr.bf16.gmra.mrb[0].mxu0 %v432
        %v487 = vpop.f32.mrb[0].mxu0
        %v488 = vadd.f32 0.0, %v487
        %v489 = vpop.f32.mrb[0].mxu0
        %v490 = vpop.f32.mrb[0].mxu0
        %v491 = vadd.f32 0.0, %v490
        %v492 = vpop.f32.mrb[0].mxu0
        %493 = vmatprep.mubr.bf16.mxu0 0
        %494 = vmatmul.mubr.bf16.gmra.mrb[0].mxu0 %v435
        %v495 = vpop.f32.mrb[0].mxu0
        %v496 = vadd.f32 0.0, %v495
        %v497 = vpop.f32.mrb[0].mxu0
        %v498 = vpop.f32.mrb[0].mxu0
        %v499 = vadd.f32 0.0, %v498
        %v500 = vpop.f32.mrb[0].mxu0
        %501 = vdwg.mxu0
        %v502 = vld [vmem:[#allocation8] sm:$0xf]
        %v503 = vld [vmem:[#allocation8 + $0x4] sm:$0xf]
        %v506 = vunpack.c.l.b16 %v502
        %v507 = vunpack.c.l.b16 %v503
        %v508 = vpack.c.b16 %v507, %v506
        %510 = vmatprep.subr.bf16.mxu0 0
        %511 = vmatpush1.bf16.msra.mxu0 %v508
        %512 = vmatprep.subr.bf16.mxu0 0
        %513 = vmatpush1.bf16.msra.mxu0 0
        %514 = vmatprep.subr.bf16.mxu0 0
        %515 = vmatpush1.bf16.msra.mxu0 0
        %516 = vmatprep.subr.bf16.mxu0 0
        %517 = vmatpush1.bf16.msra.mxu0 0
        %518 = vmatprep.subr.bf16.mxu0 0
        %519 = vmatpush1.bf16.msra.mxu0 0
        %520 = vmatprep.subr.bf16.mxu0 0
        %521 = vmatpush1.bf16.msra.mxu0 0
        %522 = vmatprep.subr.bf16.mxu0 0
        %523 = vmatpush1.bf16.msra.mxu0 0
        %524 = vmatprep.subr.bf16.mxu0 0
        %525 = vmatpush1.bf16.msra.mxu0 0
        %526 = vmatprep.subr.bf16.mxu0 0
        %527 = vmatpush1.bf16.msra.mxu0 0
        %528 = vmatprep.subr.bf16.mxu0 0
        %529 = vmatpush1.bf16.msra.mxu0 0
        %530 = vmatprep.subr.bf16.mxu0 0
        %531 = vmatpush1.bf16.msra.mxu0 0
        %532 = vmatprep.subr.bf16.mxu0 0
        %533 = vmatpush1.bf16.msra.mxu0 0
        %534 = vmatprep.subr.bf16.mxu0 0
        %535 = vmatpush1.bf16.msra.mxu0 0
        %536 = vmatprep.subr.bf16.mxu0 0
        %537 = vmatpush1.bf16.msra.mxu0 0
        %538 = vmatprep.subr.bf16.mxu0 0
        %539 = vmatpush1.bf16.msra.mxu0 0
        %540 = vmatprep.subr.bf16.mxu0 0
        %541 = vmatpush1.bf16.msra.mxu0 0
        %542 = vmatprep.mubr.bf16.mxu0 0
        %543 = vmatmul.mubr.bf16.gmra.mrb[0].mxu0 %v426
        %v544 = vpop.f32.mrb[0].mxu0
        %v545 = vadd.f32 0.0, %v544
        %v546 = vpop.f32.mrb[0].mxu0
        %v547 = vpop.f32.mrb[0].mxu0
        %v548 = vadd.f32 0.0, %v547
        %v549 = vpop.f32.mrb[0].mxu0
        %550 = vmatprep.mubr.bf16.mxu0 0
        %551 = vmatmul.mubr.bf16.gmra.mrb[0].mxu0 %v429
        %v552 = vpop.f32.mrb[0].mxu0
        %v553 = vadd.f32 0.0, %v552
        %v554 = vpop.f32.mrb[0].mxu0
        %v555 = vpop.f32.mrb[0].mxu0
        %v556 = vadd.f32 0.0, %v555
        %v557 = vpop.f32.mrb[0].mxu0
        %558 = vmatprep.mubr.bf16.mxu0 0
        %559 = vmatmul.mubr.bf16.gmra.mrb[0].mxu0 %v432
        %v560 = vpop.f32.mrb[0].mxu0
        %v561 = vadd.f32 0.0, %v560
        %v562 = vpop.f32.mrb[0].mxu0
        %v563 = vpop.f32.mrb[0].mxu0
        %v564 = vadd.f32 0.0, %v563
        %v565 = vpop.f32.mrb[0].mxu0
        %566 = vmatprep.mubr.bf16.mxu0 0
        %567 = vmatmul.mubr.bf16.gmra.mrb[0].mxu0 %v435
        %v568 = vpop.f32.mrb[0].mxu0
        %v569 = vadd.f32 0.0, %v568
        %v570 = vpop.f32.mrb[0].mxu0
        %v571 = vpop.f32.mrb[0].mxu0
        %v572 = vadd.f32 0.0, %v571
        %v573 = vpop.f32.mrb[0].mxu0
        %574 = vdwg.mxu0
        %v575 = vpack.c.bf16 %v475, %v472
        %v576 = vpack.c.bf16 %v483, %v480
        %v577 = vpack.c.bf16 %v491, %v488
        %v578 = vpack.c.bf16 %v499, %v496
        %579 = vxpose.xlu0.c.b16.start [1/8] %v575, 128
        %580 = vxpose.xlu0.c.b16.cont [2/8] 0, 128
        %581 = vxpose.xlu0.c.b16.cont [3/8] 0, 128
        %582 = vxpose.xlu0.c.b16.cont [4/8] 0, 128
        %583 = vxpose.xlu0.c.b16.cont [5/8] 0, 128
        %584 = vxpose.xlu0.c.b16.cont [6/8] 0, 128
        %585 = vxpose.xlu0.c.b16.cont [7/8] 0, 128
        %586 = vxpose.xlu0.c.b16.end [8/8] 0, 128
        %v587 = vpop.trf.xlu0
        %v588 = vpop.trf.xlu0
        %v589 = vpop.trf.xlu0
        %v590 = vpop.trf.xlu0
        %v591 = vpop.trf.xlu0
        %v592 = vpop.trf.xlu0
        %v593 = vpop.trf.xlu0
        %v594 = vpop.trf.xlu0
        %595 = vxpose.xlu0.c.b16.start [1/8] %v576, 128
        %596 = vxpose.xlu0.c.b16.cont [2/8] 0, 128
        %597 = vxpose.xlu0.c.b16.cont [3/8] 0, 128
        %598 = vxpose.xlu0.c.b16.cont [4/8] 0, 128
        %599 = vxpose.xlu0.c.b16.cont [5/8] 0, 128
        %600 = vxpose.xlu0.c.b16.cont [6/8] 0, 128
        %601 = vxpose.xlu0.c.b16.cont [7/8] 0, 128
        %602 = vxpose.xlu0.c.b16.end [8/8] 0, 128
        %v603 = vpop.trf.xlu0
        %v604 = vpop.trf.xlu0
        %v605 = vpop.trf.xlu0
        %v606 = vpop.trf.xlu0
        %v607 = vpop.trf.xlu0
        %v608 = vpop.trf.xlu0
        %v609 = vpop.trf.xlu0
        %v610 = vpop.trf.xlu0
        %611 = vxpose.xlu0.c.b16.start [1/8] %v577, 128
        %612 = vxpose.xlu0.c.b16.cont [2/8] 0, 128
        %613 = vxpose.xlu0.c.b16.cont [3/8] 0, 128
        %614 = vxpose.xlu0.c.b16.cont [4/8] 0, 128
        %615 = vxpose.xlu0.c.b16.cont [5/8] 0, 128
        %616 = vxpose.xlu0.c.b16.cont [6/8] 0, 128
        %617 = vxpose.xlu0.c.b16.cont [7/8] 0, 128
        %618 = vxpose.xlu0.c.b16.end [8/8] 0, 128
        %v619 = vpop.trf.xlu0
        %v620 = vpop.trf.xlu0
        %v621 = vpop.trf.xlu0
        %v622 = vpop.trf.xlu0
        %v623 = vpop.trf.xlu0
        %v624 = vpop.trf.xlu0
        %v625 = vpop.trf.xlu0
        %v626 = vpop.trf.xlu0
        %627 = vxpose.xlu0.c.b16.start [1/8] %v578, 128
        %628 = vxpose.xlu0.c.b16.cont [2/8] 0, 128
        %629 = vxpose.xlu0.c.b16.cont [3/8] 0, 128
        %630 = vxpose.xlu0.c.b16.cont [4/8] 0, 128
        %631 = vxpose.xlu0.c.b16.cont [5/8] 0, 128
        %632 = vxpose.xlu0.c.b16.cont [6/8] 0, 128
        %633 = vxpose.xlu0.c.b16.cont [7/8] 0, 128
        %634 = vxpose.xlu0.c.b16.end [8/8] 0, 128
        %v635 = vpop.trf.xlu0
        %v636 = vpop.trf.xlu0
        %v637 = vpop.trf.xlu0
        %v638 = vpop.trf.xlu0
        %v639 = vpop.trf.xlu0
        %v640 = vpop.trf.xlu0
        %v641 = vpop.trf.xlu0
        %v642 = vpop.trf.xlu0
        %v643 = vpack.c.bf16 %v548, %v545
        %v644 = vpack.c.bf16 %v556, %v553
        %v645 = vpack.c.bf16 %v564, %v561
        %v646 = vpack.c.bf16 %v572, %v569
        %647 = vxpose.xlu0.c.b16.start [1/8] %v643, 128
        %648 = vxpose.xlu0.c.b16.cont [2/8] 0, 128
        %649 = vxpose.xlu0.c.b16.cont [3/8] 0, 128
        %650 = vxpose.xlu0.c.b16.cont [4/8] 0, 128
        %651 = vxpose.xlu0.c.b16.cont [5/8] 0, 128
        %652 = vxpose.xlu0.c.b16.cont [6/8] 0, 128
        %653 = vxpose.xlu0.c.b16.cont [7/8] 0, 128
        %654 = vxpose.xlu0.c.b16.end [8/8] 0, 128
        %v655 = vpop.trf.xlu0
        %v656 = vpop.trf.xlu0
        %v657 = vpop.trf.xlu0
        %v658 = vpop.trf.xlu0
        %v659 = vpop.trf.xlu0
        %v660 = vpop.trf.xlu0
        %v661 = vpop.trf.xlu0
        %v662 = vpop.trf.xlu0
        %663 = vxpose.xlu0.c.b16.start [1/8] %v644, 128
        %664 = vxpose.xlu0.c.b16.cont [2/8] 0, 128
        %665 = vxpose.xlu0.c.b16.cont [3/8] 0, 128
        %666 = vxpose.xlu0.c.b16.cont [4/8] 0, 128
        %667 = vxpose.xlu0.c.b16.cont [5/8] 0, 128
        %668 = vxpose.xlu0.c.b16.cont [6/8] 0, 128
        %669 = vxpose.xlu0.c.b16.cont [7/8] 0, 128
        %670 = vxpose.xlu0.c.b16.end [8/8] 0, 128
        %v671 = vpop.trf.xlu0
        %v672 = vpop.trf.xlu0
        %v673 = vpop.trf.xlu0
        %v674 = vpop.trf.xlu0
        %v675 = vpop.trf.xlu0
        %v676 = vpop.trf.xlu0
        %v677 = vpop.trf.xlu0
        %v678 = vpop.trf.xlu0
        %679 = vxpose.xlu0.c.b16.start [1/8] %v645, 128
        %680 = vxpose.xlu0.c.b16.cont [2/8] 0, 128
        %681 = vxpose.xlu0.c.b16.cont [3/8] 0, 128
        %682 = vxpose.xlu0.c.b16.cont [4/8] 0, 128
        %683 = vxpose.xlu0.c.b16.cont [5/8] 0, 128
        %684 = vxpose.xlu0.c.b16.cont [6/8] 0, 128
        %685 = vxpose.xlu0.c.b16.cont [7/8] 0, 128
        %686 = vxpose.xlu0.c.b16.end [8/8] 0, 128
        %v687 = vpop.trf.xlu0
        %v688 = vpop.trf.xlu0
        %v689 = vpop.trf.xlu0
        %v690 = vpop.trf.xlu0
        %v691 = vpop.trf.xlu0
        %v692 = vpop.trf.xlu0
        %v693 = vpop.trf.xlu0
        %v694 = vpop.trf.xlu0
        %695 = vxpose.xlu0.c.b16.start [1/8] %v646, 128
        %696 = vxpose.xlu0.c.b16.cont [2/8] 0, 128
        %697 = vxpose.xlu0.c.b16.cont [3/8] 0, 128
        %698 = vxpose.xlu0.c.b16.cont [4/8] 0, 128
        %699 = vxpose.xlu0.c.b16.cont [5/8] 0, 128
        %700 = vxpose.xlu0.c.b16.cont [6/8] 0, 128
        %701 = vxpose.xlu0.c.b16.cont [7/8] 0, 128
        %702 = vxpose.xlu0.c.b16.end [8/8] 0, 128
        %v703 = vpop.trf.xlu0
        %v704 = vpop.trf.xlu0
        %v705 = vpop.trf.xlu0
        %v706 = vpop.trf.xlu0
        %v707 = vpop.trf.xlu0
        %v708 = vpop.trf.xlu0
        %v709 = vpop.trf.xlu0
        %v710 = vpop.trf.xlu0
        %v711 = vld [vmem:[#allocation10] sm:$0xf]
        %v712 = vld [vmem:[#allocation10 + $0x4] sm:$0xf]
        %v715 = vunpack.c.l.b16 %v711
        %v716 = vunpack.c.l.b16 %v712
        %v717 = vpack.c.b16 %v716, %v715
        %v720 = vsel %vm424, %v587, 0
        %v723 = vsel %vm424, %v603, 0
        %v726 = vsel %vm424, %v619, 0
        %v729 = vsel %vm424, %v635, 0
        %731 = vmatprep.subr.bf16.mxu0 0
        %732 = vmatpush1.bf16.msra.mxu0 %v717
        %733 = vmatprep.subr.bf16.mxu0 0
        %734 = vmatpush1.bf16.msra.mxu0 0
        %735 = vmatprep.subr.bf16.mxu0 0
        %736 = vmatpush1.bf16.msra.mxu0 0
        %737 = vmatprep.subr.bf16.mxu0 0
        %738 = vmatpush1.bf16.msra.mxu0 0
        %739 = vmatprep.subr.bf16.mxu0 0
        %740 = vmatpush1.bf16.msra.mxu0 0
        %741 = vmatprep.subr.bf16.mxu0 0
        %742 = vmatpush1.bf16.msra.mxu0 0
        %743 = vmatprep.subr.bf16.mxu0 0
        %744 = vmatpush1.bf16.msra.mxu0 0
        %745 = vmatprep.subr.bf16.mxu0 0
        %746 = vmatpush1.bf16.msra.mxu0 0
        %747 = vmatprep.subr.bf16.mxu0 0
        %748 = vmatpush1.bf16.msra.mxu0 0
        %749 = vmatprep.subr.bf16.mxu0 0
        %750 = vmatpush1.bf16.msra.mxu0 0
        %751 = vmatprep.subr.bf16.mxu0 0
        %752 = vmatpush1.bf16.msra.mxu0 0
        %753 = vmatprep.subr.bf16.mxu0 0
        %754 = vmatpush1.bf16.msra.mxu0 0
        %755 = vmatprep.subr.bf16.mxu0 0
        %756 = vmatpush1.bf16.msra.mxu0 0
        %757 = vmatprep.subr.bf16.mxu0 0
        %758 = vmatpush1.bf16.msra.mxu0 0
        %759 = vmatprep.subr.bf16.mxu0 0
        %760 = vmatpush1.bf16.msra.mxu0 0
        %761 = vmatprep.subr.bf16.mxu0 0
        %762 = vmatpush1.bf16.msra.mxu0 0
        %763 = vmatprep.mubr.bf16.mxu0 0
        %764 = vmatmul.mubr.bf16.gmra.mrb[0].mxu0 %v720
        %v765 = vpop.f32.mrb[0].mxu0
        %v766 = vadd.f32 0.0, %v765
        %v767 = vpop.f32.mrb[0].mxu0
        %v768 = vpop.f32.mrb[0].mxu0
        %v769 = vadd.f32 0.0, %v768
        %v770 = vpop.f32.mrb[0].mxu0
        %771 = vmatprep.mubr.bf16.mxu0 0
        %772 = vmatmul.mubr.bf16.gmra.mrb[0].mxu0 %v723
        %v773 = vpop.f32.mrb[0].mxu0
        %v774 = vadd.f32 0.0, %v773
        %v775 = vpop.f32.mrb[0].mxu0
        %v776 = vpop.f32.mrb[0].mxu0
        %v777 = vadd.f32 0.0, %v776
        %v778 = vpop.f32.mrb[0].mxu0
        %779 = vmatprep.mubr.bf16.mxu0 0
        %780 = vmatmul.mubr.bf16.gmra.mrb[0].mxu0 %v726
        %v781 = vpop.f32.mrb[0].mxu0
        %v782 = vadd.f32 0.0, %v781
        %v783 = vpop.f32.mrb[0].mxu0
        %v784 = vpop.f32.mrb[0].mxu0
        %v785 = vadd.f32 0.0, %v784
        %v786 = vpop.f32.mrb[0].mxu0
        %787 = vmatprep.mubr.bf16.mxu0 0
        %788 = vmatmul.mubr.bf16.gmra.mrb[0].mxu0 %v729
        %v789 = vpop.f32.mrb[0].mxu0
        %v790 = vadd.f32 0.0, %v789
        %v791 = vpop.f32.mrb[0].mxu0
        %v792 = vpop.f32.mrb[0].mxu0
        %v793 = vadd.f32 0.0, %v792
        %v794 = vpop.f32.mrb[0].mxu0
        %795 = vdwg.mxu0
        %v796 = vld [vmem:[#allocation11] sm:$0xf]
        %v797 = vld [vmem:[#allocation11 + $0x4] sm:$0xf]
        %v799 = vsel %vm424, %v655, 0
        %v802 = vsel %vm424, %v671, 0
        %v805 = vsel %vm424, %v687, 0
        %v808 = vsel %vm424, %v703, 0
        %810 = vmatprep.subr.bf16.mxu0 0
        %811 = vmatpush1.bf16.msra.mxu0 %v717
        %812 = vmatprep.subr.bf16.mxu0 0
        %813 = vmatpush1.bf16.msra.mxu0 0
        %814 = vmatprep.subr.bf16.mxu0 0
        %815 = vmatpush1.bf16.msra.mxu0 0
        %816 = vmatprep.subr.bf16.mxu0 0
        %817 = vmatpush1.bf16.msra.mxu0 0
        %818 = vmatprep.subr.bf16.mxu0 0
        %819 = vmatpush1.bf16.msra.mxu0 0
        %820 = vmatprep.subr.bf16.mxu0 0
        %821 = vmatpush1.bf16.msra.mxu0 0
        %822 = vmatprep.subr.bf16.mxu0 0
        %823 = vmatpush1.bf16.msra.mxu0 0
        %824 = vmatprep.subr.bf16.mxu0 0
        %825 = vmatpush1.bf16.msra.mxu0 0
        %826 = vmatprep.subr.bf16.mxu0 0
        %827 = vmatpush1.bf16.msra.mxu0 0
        %828 = vmatprep.subr.bf16.mxu0 0
        %829 = vmatpush1.bf16.msra.mxu0 0
        %830 = vmatprep.subr.bf16.mxu0 0
        %831 = vmatpush1.bf16.msra.mxu0 0
        %832 = vmatprep.subr.bf16.mxu0 0
        %833 = vmatpush1.bf16.msra.mxu0 0
        %834 = vmatprep.subr.bf16.mxu0 0
        %835 = vmatpush1.bf16.msra.mxu0 0
        %836 = vmatprep.subr.bf16.mxu0 0
        %837 = vmatpush1.bf16.msra.mxu0 0
        %838 = vmatprep.subr.bf16.mxu0 0
        %839 = vmatpush1.bf16.msra.mxu0 0
        %840 = vmatprep.subr.bf16.mxu0 0
        %841 = vmatpush1.bf16.msra.mxu0 0
        %842 = vmatprep.mubr.bf16.mxu0 0
        %843 = vmatmul.mubr.bf16.gmra.mrb[0].mxu0 %v799
        %v844 = vpop.f32.mrb[0].mxu0
        %v845 = vadd.f32 0.0, %v844
        %v846 = vpop.f32.mrb[0].mxu0
        %v847 = vpop.f32.mrb[0].mxu0
        %v848 = vadd.f32 0.0, %v847
        %v849 = vpop.f32.mrb[0].mxu0
        %850 = vmatprep.mubr.bf16.mxu0 0
        %851 = vmatmul.mubr.bf16.gmra.mrb[0].mxu0 %v802
        %v852 = vpop.f32.mrb[0].mxu0
        %v853 = vadd.f32 0.0, %v852
        %v854 = vpop.f32.mrb[0].mxu0
        %v855 = vpop.f32.mrb[0].mxu0
        %v856 = vadd.f32 0.0, %v855
        %v857 = vpop.f32.mrb[0].mxu0
        %858 = vmatprep.mubr.bf16.mxu0 0
        %859 = vmatmul.mubr.bf16.gmra.mrb[0].mxu0 %v805
        %v860 = vpop.f32.mrb[0].mxu0
        %v861 = vadd.f32 0.0, %v860
        %v862 = vpop.f32.mrb[0].mxu0
        %v863 = vpop.f32.mrb[0].mxu0
        %v864 = vadd.f32 0.0, %v863
        %v865 = vpop.f32.mrb[0].mxu0
        %866 = vmatprep.mubr.bf16.mxu0 0
        %867 = vmatmul.mubr.bf16.gmra.mrb[0].mxu0 %v808
        %v868 = vpop.f32.mrb[0].mxu0
        %v869 = vadd.f32 0.0, %v868
        %v870 = vpop.f32.mrb[0].mxu0
        %v871 = vpop.f32.mrb[0].mxu0
        %v872 = vadd.f32 0.0, %v871
        %v873 = vpop.f32.mrb[0].mxu0
        %874 = vdwg.mxu0
        %v877 = vunpack.c.l.b16 %v796
        %v878 = vunpack.c.l.b16 %v797
        %v879 = vpack.c.b16 %v878, %v877
        %881 = vmatprep.subr.bf16.mxu0 0
        %882 = vmatpush1.bf16.msra.mxu0 %v879
        %883 = vmatprep.subr.bf16.mxu0 0
        %884 = vmatpush1.bf16.msra.mxu0 0
        %885 = vmatprep.subr.bf16.mxu0 0
        %886 = vmatpush1.bf16.msra.mxu0 0
        %887 = vmatprep.subr.bf16.mxu0 0
        %888 = vmatpush1.bf16.msra.mxu0 0
        %889 = vmatprep.subr.bf16.mxu0 0
        %890 = vmatpush1.bf16.msra.mxu0 0
        %891 = vmatprep.subr.bf16.mxu0 0
        %892 = vmatpush1.bf16.msra.mxu0 0
        %893 = vmatprep.subr.bf16.mxu0 0
        %894 = vmatpush1.bf16.msra.mxu0 0
        %895 = vmatprep.subr.bf16.mxu0 0
        %896 = vmatpush1.bf16.msra.mxu0 0
        %897 = vmatprep.subr.bf16.mxu0 0
        %898 = vmatpush1.bf16.msra.mxu0 0
        %899 = vmatprep.subr.bf16.mxu0 0
        %900 = vmatpush1.bf16.msra.mxu0 0
        %901 = vmatprep.subr.bf16.mxu0 0
        %902 = vmatpush1.bf16.msra.mxu0 0
        %903 = vmatprep.subr.bf16.mxu0 0
        %904 = vmatpush1.bf16.msra.mxu0 0
        %905 = vmatprep.subr.bf16.mxu0 0
        %906 = vmatpush1.bf16.msra.mxu0 0
        %907 = vmatprep.subr.bf16.mxu0 0
        %908 = vmatpush1.bf16.msra.mxu0 0
        %909 = vmatprep.subr.bf16.mxu0 0
        %910 = vmatpush1.bf16.msra.mxu0 0
        %911 = vmatprep.subr.bf16.mxu0 0
        %912 = vmatpush1.bf16.msra.mxu0 0
        %913 = vmatprep.mubr.bf16.mxu0 0
        %914 = vmatmul.mubr.bf16.gmra.mrb[0].mxu0 %v799
        %v915 = vpop.f32.mrb[0].mxu0
        %v916 = vadd.f32 0.0, %v915
        %v917 = vpop.f32.mrb[0].mxu0
        %v918 = vpop.f32.mrb[0].mxu0
        %v919 = vadd.f32 0.0, %v918
        %v920 = vpop.f32.mrb[0].mxu0
        %921 = vmatprep.mubr.bf16.mxu0 0
        %922 = vmatmul.mubr.bf16.gmra.mrb[0].mxu0 %v802
        %v923 = vpop.f32.mrb[0].mxu0
        %v924 = vadd.f32 0.0, %v923
        %v925 = vpop.f32.mrb[0].mxu0
        %v926 = vpop.f32.mrb[0].mxu0
        %v927 = vadd.f32 0.0, %v926
        %v928 = vpop.f32.mrb[0].mxu0
        %929 = vmatprep.mubr.bf16.mxu0 0
        %930 = vmatmul.mubr.bf16.gmra.mrb[0].mxu0 %v805
        %v931 = vpop.f32.mrb[0].mxu0
        %v932 = vadd.f32 0.0, %v931
        %v933 = vpop.f32.mrb[0].mxu0
        %v934 = vpop.f32.mrb[0].mxu0
        %v935 = vadd.f32 0.0, %v934
        %v936 = vpop.f32.mrb[0].mxu0
        %937 = vmatprep.mubr.bf16.mxu0 0
        %938 = vmatmul.mubr.bf16.gmra.mrb[0].mxu0 %v808
        %v939 = vpop.f32.mrb[0].mxu0
        %v940 = vadd.f32 0.0, %v939
        %v941 = vpop.f32.mrb[0].mxu0
        %v942 = vpop.f32.mrb[0].mxu0
        %v943 = vadd.f32 0.0, %v942
        %v944 = vpop.f32.mrb[0].mxu0
        %945 = vdwg.mxu0
        %v946 = vsub.f32 %v766, %v916
        %v947 = vsub.f32 %v769, %v919
        %v948 = vsub.f32 %v774, %v924
        %v949 = vsub.f32 %v777, %v927
        %v950 = vsub.f32 %v782, %v932
        %v951 = vsub.f32 %v785, %v935
        %v952 = vsub.f32 %v790, %v940
        %v953 = vsub.f32 %v793, %v943
        %954 = vmatprep.subr.bf16.mxu0 0
        %955 = vmatpush1.bf16.msra.mxu0 %v879
        %956 = vmatprep.subr.bf16.mxu0 0
        %957 = vmatpush1.bf16.msra.mxu0 0
        %958 = vmatprep.subr.bf16.mxu0 0
        %959 = vmatpush1.bf16.msra.mxu0 0
        %960 = vmatprep.subr.bf16.mxu0 0
        %961 = vmatpush1.bf16.msra.mxu0 0
        %962 = vmatprep.subr.bf16.mxu0 0
        %963 = vmatpush1.bf16.msra.mxu0 0
        %964 = vmatprep.subr.bf16.mxu0 0
        %965 = vmatpush1.bf16.msra.mxu0 0
        %966 = vmatprep.subr.bf16.mxu0 0
        %967 = vmatpush1.bf16.msra.mxu0 0
        %968 = vmatprep.subr.bf16.mxu0 0
        %969 = vmatpush1.bf16.msra.mxu0 0
        %970 = vmatprep.subr.bf16.mxu0 0
        %971 = vmatpush1.bf16.msra.mxu0 0
        %972 = vmatprep.subr.bf16.mxu0 0
        %973 = vmatpush1.bf16.msra.mxu0 0
        %974 = vmatprep.subr.bf16.mxu0 0
        %975 = vmatpush1.bf16.msra.mxu0 0
        %976 = vmatprep.subr.bf16.mxu0 0
        %977 = vmatpush1.bf16.msra.mxu0 0
        %978 = vmatprep.subr.bf16.mxu0 0
        %979 = vmatpush1.bf16.msra.mxu0 0
        %980 = vmatprep.subr.bf16.mxu0 0
        %981 = vmatpush1.bf16.msra.mxu0 0
        %982 = vmatprep.subr.bf16.mxu0 0
        %983 = vmatpush1.bf16.msra.mxu0 0
        %984 = vmatprep.subr.bf16.mxu0 0
        %985 = vmatpush1.bf16.msra.mxu0 0
        %986 = vmatprep.mubr.bf16.mxu0 0
        %987 = vmatmul.mubr.bf16.gmra.mrb[0].mxu0 %v720
        %v988 = vpop.f32.mrb[0].mxu0
        %v989 = vadd.f32 %v845, %v988
        %v990 = vpop.f32.mrb[0].mxu0
        %v991 = vpop.f32.mrb[0].mxu0
        %v992 = vadd.f32 %v848, %v991
        %v993 = vpop.f32.mrb[0].mxu0
        %994 = vmatprep.mubr.bf16.mxu0 0
        %995 = vmatmul.mubr.bf16.gmra.mrb[0].mxu0 %v723
        %v996 = vpop.f32.mrb[0].mxu0
        %v997 = vadd.f32 %v853, %v996
        %v998 = vpop.f32.mrb[0].mxu0
        %v999 = vpop.f32.mrb[0].mxu0
        %v1000 = vadd.f32 %v856, %v999
        %v1001 = vpop.f32.mrb[0].mxu0
        %1002 = vmatprep.mubr.bf16.mxu0 0
        %1003 = vmatmul.mubr.bf16.gmra.mrb[0].mxu0 %v726
        %v1004 = vpop.f32.mrb[0].mxu0
        %v1005 = vadd.f32 %v861, %v1004
        %v1006 = vpop.f32.mrb[0].mxu0
        %v1007 = vpop.f32.mrb[0].mxu0
        %v1008 = vadd.f32 %v864, %v1007
        %v1009 = vpop.f32.mrb[0].mxu0
        %1010 = vmatprep.mubr.bf16.mxu0 0
        %1011 = vmatmul.mubr.bf16.gmra.mrb[0].mxu0 %v729
        %v1012 = vpop.f32.mrb[0].mxu0
        %v1013 = vadd.f32 %v869, %v1012
        %v1014 = vpop.f32.mrb[0].mxu0
        %v1015 = vpop.f32.mrb[0].mxu0
        %v1016 = vadd.f32 %v872, %v1015
        %v1017 = vpop.f32.mrb[0].mxu0
        %1018 = vdwg.mxu0
        %v1019 = vmul.f32 %v946, %v946
        %v1020 = vmul.f32 %v947, %v947
        %v1021 = vmul.f32 %v948, %v948
        %v1022 = vmul.f32 %v949, %v949
        %v1023 = vmul.f32 %v950, %v950
        %v1024 = vmul.f32 %v951, %v951
        %v1025 = vmul.f32 %v952, %v952
        %v1026 = vmul.f32 %v953, %v953
        %v1027 = vmul.f32 %v989, %v989
        %v1028 = vmul.f32 %v992, %v992
        %v1029 = vmul.f32 %v997, %v997
        %v1030 = vmul.f32 %v1000, %v1000
        %v1031 = vmul.f32 %v1005, %v1005
        %v1032 = vmul.f32 %v1008, %v1008
        %v1033 = vmul.f32 %v1013, %v1013
        %v1034 = vmul.f32 %v1016, %v1016
        %v1035 = vadd.f32 %v1019, %v1027
        %v1036 = vadd.f32 %v1020, %v1028
        %v1037 = vadd.f32 %v1021, %v1029
        %v1038 = vadd.f32 %v1022, %v1030
        %v1039 = vadd.f32 %v1023, %v1031
        %v1040 = vadd.f32 %v1024, %v1032
        %v1041 = vadd.f32 %v1025, %v1033
        %v1042 = vadd.f32 %v1026, %v1034
        %v1043 = vrsqrt.pop %v1035
        %v1044 = vmul.f32 %v1035, %v1043
        %vm1045 = vcmp.eq.f32.partialorder %v1035, inf
        %v1046 = vsel %vm1045, %v1035, %v1044
        %vm1047 = vcmp.eq.f32.partialorder %v1035, 0.0
        %v1048 = vand.u32 %v1035, 2147483648
        %v1049 = vsel %vm1047, %v1048, %v1046
        %v1050 = vrsqrt.pop %v1036
        %v1051 = vmul.f32 %v1036, %v1050
        %vm1052 = vcmp.eq.f32.partialorder %v1036, inf
        %v1053 = vsel %vm1052, %v1036, %v1051
        %vm1054 = vcmp.eq.f32.partialorder %v1036, 0.0
        %v1055 = vand.u32 %v1036, 2147483648
        %v1056 = vsel %vm1054, %v1055, %v1053
        %v1057 = vrsqrt.pop %v1037
        %v1058 = vmul.f32 %v1037, %v1057
        %vm1059 = vcmp.eq.f32.partialorder %v1037, inf
        %v1060 = vsel %vm1059, %v1037, %v1058
        %vm1061 = vcmp.eq.f32.partialorder %v1037, 0.0
        %v1062 = vand.u32 %v1037, 2147483648
        %v1063 = vsel %vm1061, %v1062, %v1060
        %v1064 = vrsqrt.pop %v1038
        %v1065 = vmul.f32 %v1038, %v1064
        %vm1066 = vcmp.eq.f32.partialorder %v1038, inf
        %v1067 = vsel %vm1066, %v1038, %v1065
        %vm1068 = vcmp.eq.f32.partialorder %v1038, 0.0
        %v1069 = vand.u32 %v1038, 2147483648
        %v1070 = vsel %vm1068, %v1069, %v1067
        %v1071 = vrsqrt.pop %v1039
        %v1072 = vmul.f32 %v1039, %v1071
        %vm1073 = vcmp.eq.f32.partialorder %v1039, inf
        %v1074 = vsel %vm1073, %v1039, %v1072
        %vm1075 = vcmp.eq.f32.partialorder %v1039, 0.0
        %v1076 = vand.u32 %v1039, 2147483648
        %v1077 = vsel %vm1075, %v1076, %v1074
        %v1078 = vrsqrt.pop %v1040
        %v1079 = vmul.f32 %v1040, %v1078
        %vm1080 = vcmp.eq.f32.partialorder %v1040, inf
        %v1081 = vsel %vm1080, %v1040, %v1079
        %vm1082 = vcmp.eq.f32.partialorder %v1040, 0.0
        %v1083 = vand.u32 %v1040, 2147483648
        %v1084 = vsel %vm1082, %v1083, %v1081
        %v1085 = vrsqrt.pop %v1041
        %v1086 = vmul.f32 %v1041, %v1085
        %vm1087 = vcmp.eq.f32.partialorder %v1041, inf
        %v1088 = vsel %vm1087, %v1041, %v1086
        %vm1089 = vcmp.eq.f32.partialorder %v1041, 0.0
        %v1090 = vand.u32 %v1041, 2147483648
        %v1091 = vsel %vm1089, %v1090, %v1088
        %v1092 = vrsqrt.pop %v1042
        %v1093 = vmul.f32 %v1042, %v1092
        %vm1094 = vcmp.eq.f32.partialorder %v1042, inf
        %v1095 = vsel %vm1094, %v1042, %v1093
        %vm1096 = vcmp.eq.f32.partialorder %v1042, 0.0
        %v1097 = vand.u32 %v1042, 2147483648
        %v1098 = vsel %vm1096, %v1097, %v1095
        %v1099 = vsel %vm424, %v1049, 0.0
        %v1100 = vsel %vm424, %v1056, 0.0
        %v1101 = vadd.f32 %v1099, %v1100
        %v1102 = vsel %vm424, %v1063, 0.0
        %v1103 = vadd.f32 %v1101, %v1102
        %v1104 = vsel %vm424, %v1070, 0.0
        %v1105 = vadd.f32 %v1103, %v1104
        %v1106 = vsel %vm424, %v1077, 0.0
        %v1107 = vadd.f32 %v1105, %v1106
        %v1108 = vsel %vm424, %v1084, 0.0
        %v1109 = vadd.f32 %v1107, %v1108
        %v1110 = vsel %vm424, %v1091, 0.0
        %v1111 = vadd.f32 %v1109, %v1110
        %v1112 = vsel %vm424, %v1098, 0.0
        %v1113 = vadd.f32 %v1111, %v1112
        %1114 = vadd.xlane.f32.xlu0 %v1113
        %v1115 = vpop.xlane.xlu0 %1114
        %v1116 = vrot.slane %v1115, 4
        %v1117 = vadd.f32 %v1115, %v1116
        %v1118 = vrot.slane %v1117, 2
        %v1119 = vadd.f32 %v1117, %v1118
        %v1120 = vrot.slane %v1119, 1
        %v1121 = vadd.f32 %v1119, %v1120
        %s1122 = vtos %v1121
        %v1123 = vlaneseq
        %v1124 = vshrl.u32 %v1123, 7
        %v1125 = vlaneseq
        %v1126 = vand.u32 %v1125, 127
        %vm1127 = vcmp.eq.s32.totalorder %v1124, 0
        %vm1128 = vcmp.eq.s32.totalorder %v1126, 0
        %vm1129 = vmand %vm1127, %vm1128
        %v1130 = vstv %s1122
        %v1131 = vsel %vm1129, %v1130, 0.0
        %1132 = vst [vmem:[%s369] sm:$0xff] %v1131
        %s1133 = sand.u32 %s172, 1
        %s1134 = scalar_lea.sflag [#allocation4], %s1133
        %s1135 = sand.u32 %s172, 1
        %s1136 = smul.addr %s1135, 8
        %s1137 = scalar_lea.vmem [#allocation13], %s1136
        // Predicated region
        $region69: #{tpu_custom_call.1} parent=43 // pred_check
          %p1138 = pneg %p182
        $region70: #{tpu_custom_call.1} parent=43 // pred_check_branch
          %1140 = sbr.rel (%p1138) target = $region72
        $region71: #{tpu_custom_call.1} parent=43 // pred_region
          %s1142 = ssub.s32 128, 128
          %1143 = vsyncadd %s1134, %s1142
          %s1144 = smul.addr %s28, 128
          %s1145 = scalar_lea.hbm %s6, %s1144
          %s1147 = sshll.u32 %s1137, 4
          %s1148 = int_to_ptr.vmem [resolvable:$true] %s1147
          %1150 = dma.vmem_to_hbm [thread:$0]  %s1148, 128, %s1145, %s1134
        $region72: #{tpu_custom_call.1} parent=43 // pred_fallthru
          _
      $region44: #{tpu_custom_call.1} parent=5 // pred_fallthru
        _
      %p1151 = scmp.le.s32.totalorder 2, %s23
      // Predicated region
      $region73: #{tpu_custom_call.1} parent=5 // pred_check
        %p1152 = pneg %p1151
      $region74: #{tpu_custom_call.1} parent=5 // pred_check_branch
        %1154 = sbr.rel (%p1152) target = $region76
      $region75: #{tpu_custom_call.1} parent=5 // pred_region
        %s1155 = ssub.s32 %s23, 2
        // Predicated region
        $region77: #{tpu_custom_call.1} parent=75 // pred_check
          %p1156 = pneg %p188
        $region78: #{tpu_custom_call.1} parent=75 // pred_check_branch
          %1158 = sbr.rel (%p1156) target = $region80
        $region79: #{tpu_custom_call.1} parent=75 // pred_region
          %s1159 = sand.u32 %s173, 1
          %s1160 = scalar_lea.sflag [#allocation4], %s1159
          %s1161 = sand.u32 %s173, 1
          %s1162 = smul.addr %s1161, 8
          %s1163 = scalar_lea.vmem [#allocation13], %s1162
          %1164 = dma.done %s1160, 128
        $region80: #{tpu_custom_call.1} parent=75 // pred_fallthru
          _
      $region76: #{tpu_custom_call.1} parent=5 // pred_fallthru
        _
    $region6: #{tpu_custom_call.1} parent=1 // loop_footer
      %s27 = sadd.s32 1, %s23
    $region7: #{tpu_custom_call.1} parent=1 // loop_footer_branch
      %22 = sbr.rel target = $region3
    $region8: #{tpu_custom_call.1} parent=1 // loop_exit
      _
    %1165 = vsyncpa [#allocation3], 1
    %s1166 = scalar_lea.sflag [#allocation3], 1
    %1167 = vsyncpa %s1166, 1
    %1168 = vsyncpa [#allocation6], 1
    %s1169 = scalar_lea.sflag [#allocation6], 1
    %1170 = vsyncpa %s1169, 1
    %1171 = vsyncpa [#allocation9], 1
    %1172 = vsyncpa [#allocation12], 1
    %1173 = vsyncpa [#allocation4], 1
    %s1174 = scalar_lea.sflag [#allocation4], 1
    %1175 = vsyncpa %s1174, 1

</llo_original>
